<compile_context>
chip_gen: v5e
topology: v5e:2x2
jax: 0.10.0
libtpu: 0.0.40
codegen_flags: <defaults>
</compile_context>

<pallas_src>
import functools

import jax
import jax.numpy as jnp
from jax.experimental import pallas as pl
from jax.experimental.pallas import tpu as pltpu

LANE = 128
SUBLANE = 8
RESIDENT_LIMIT_BYTES = 8 * 1024 * 1024   # per-buffer cap for VMEM-resident feature operand
VMEM_CAP_BYTES = 48 * 1024 * 1024        # leave headroom on v7x (64 MiB physical)


def _round_up(x, m):
    return ((x + m - 1) // m) * m


def _pick_tiles(n_pad, tm_max=1024, tk_max=2048):
    """Largest (tm, tk) <= (tm_max, tk_max) that divide n_pad (n_pad % 128 == 0)."""
    tm = min(tm_max, n_pad)
    while n_pad % tm:
        tm -= LANE
    tk = min(tk_max, n_pad)
    while n_pad % tk:
        tk -= LANE
    return tm, tk


def _pad2d(x, rows, cols, dtype):
    out = jnp.zeros((rows, cols), dtype)
    return out.at[: x.shape[0], : x.shape[1]].set(x.astype(dtype))


# ---------------------------------------------------------------------------
# Layer 1 (fused): p2 = relu((Â @ X) @ W1 + b1) @ W2
#   grid = (row tiles of Â, k tiles of Â); f32 (tm, in_pad) accumulator.
#   W1, b1, W2 are VMEM-resident (constant block index); X resident if small.
# ---------------------------------------------------------------------------
def _layer1_kernel(a_ref, x_ref, w1_ref, b1_ref, w2_ref, o_ref, acc_ref, *,
                   tk, x_resident):
    k = pl.program_id(1)

    @pl.when(k == 0)
    def _():
        acc_ref[...] = jnp.zeros_like(acc_ref)

    if x_resident:
        start = pl.multiple_of(k * tk, tk)
        x_tile = x_ref[pl.ds(start, tk), :]
    else:
        x_tile = x_ref[...]

    acc_ref[...] += jnp.dot(a_ref[...], x_tile, preferred_element_type=jnp.float32)

    @pl.when(k == pl.num_programs(1) - 1)
    def _():
        h1 = jnp.dot(acc_ref[...].astype(jnp.bfloat16), w1_ref[...],
                     preferred_element_type=jnp.float32) + b1_ref[...]
        h1 = jnp.maximum(h1, 0.0)
        # Dropout(p=0.8) applies to h1 between layers; identity in eval mode.
        o_ref[...] = jnp.dot(h1.astype(jnp.bfloat16), w2_ref[...],
                             preferred_element_type=jnp.float32).astype(o_ref.dtype)


def layer1_fused(a_bf16, x_bf16, w1_bf16, b1_f32, w2_bf16, *, tm, tk):
    n_pad = a_bf16.shape[0]
    in_pad = x_bf16.shape[1]
    h_pad = w1_bf16.shape[1]
    o_pad = w2_bf16.shape[1]

    # TODO(synk): for very wide in_size (> ~128) projecting X@W1 first would stream
    # fewer bytes; this path is tuned for the small-in_size regime of the module.
    x_resident = n_pad * in_pad * 2 <= RESIDENT_LIMIT_BYTES
    if x_resident:
        x_spec = pl.BlockSpec((n_pad, in_pad), lambda i, k: (0, 0))
        x_bytes = 2 * n_pad * in_pad * 2
    else:
        x_spec = pl.BlockSpec((tk, in_pad), lambda i, k: (k, 0))
        x_bytes = 2 * tk * in_pad * 2

    vmem_need = (2 * tm * tk * 2 + x_bytes
                 + 2 * in_pad * h_pad * 2 + 2 * SUBLANE * h_pad * 4
                 + 2 * h_pad * o_pad * 2 + 2 * tm * o_pad * 2
                 + tm * in_pad * 4)
    vmem_limit = int(min(max(vmem_need + (8 << 20), 16 << 20), VMEM_CAP_BYTES))

    kernel = functools.partial(_layer1_kernel, tk=tk, x_resident=x_resident)
    return pl.pallas_call(
        kernel,
        out_shape=jax.ShapeDtypeStruct((n_pad, o_pad), jnp.bfloat16),
        grid=(n_pad // tm, n_pad // tk),
        in_specs=[
            pl.BlockSpec((tm, tk), lambda i, k: (i, k)),        # Â row/col tile
            x_spec,                                             # raw features X
            pl.BlockSpec((in_pad, h_pad), lambda i, k: (0, 0)),  # W1 (resident)
            pl.BlockSpec((1, h_pad), lambda i, k: (0, 0)),       # b1 (resident)
            pl.BlockSpec((h_pad, o_pad), lambda i, k: (0, 0)),   # W2 (resident)
        ],
        out_specs=pl.BlockSpec((tm, o_pad), lambda i, k: (i, 0)),
        scratch_shapes=[pltpu.VMEM((tm, in_pad), jnp.float32)],
        compiler_params=pltpu.CompilerParams(
            dimension_semantics=("parallel", "arbitrary"),
            vmem_limit_bytes=vmem_limit,
        ),
    )(a_bf16, x_bf16, w1_bf16, b1_f32, w2_bf16)


# ---------------------------------------------------------------------------
# Layer 2: out = Â @ P2 + b2
#   f32 output block is resident along k -> accumulate directly into o_ref.
#   P2 is VMEM-resident (constant block index) when it fits, else streamed.
# ---------------------------------------------------------------------------
def _layer2_kernel(a_ref, p_ref, b_ref, o_ref, *, tk, p_resident):
    k = pl.program_id(1)

    @pl.when(k == 0)
    def _():
        o_ref[...] = jnp.zeros_like(o_ref) + b_ref[...]   # bias init via broadcast-add

    if p_resident:
        start = pl.multiple_of(k * tk, tk)
        p_tile = p_ref[pl.ds(start, tk), :]
    else:
        p_tile = p_ref[...]

    o_ref[...] += jnp.dot(a_ref[...], p_tile, preferred_element_type=jnp.float32)


def layer2_aggregate(a_bf16, p2_bf16, b2_f32, *, tm, tk):
    n_pad = a_bf16.shape[0]
    o_pad = p2_bf16.shape[1]

    p_resident = n_pad * o_pad * 2 <= RESIDENT_LIMIT_BYTES
    if p_resident:
        p_spec = pl.BlockSpec((n_pad, o_pad), lambda i, k: (0, 0))
        p_bytes = 2 * n_pad * o_pad * 2
    else:
        p_spec = pl.BlockSpec((tk, o_pad), lambda i, k: (k, 0))
        p_bytes = 2 * tk * o_pad * 2

    vmem_need = (2 * tm * tk * 2 + p_bytes
                 + 2 * SUBLANE * o_pad * 4 + 2 * tm * o_pad * 4)
    vmem_limit = int(min(max(vmem_need + (8 << 20), 16 << 20), VMEM_CAP_BYTES))

    kernel = functools.partial(_layer2_kernel, tk=tk, p_resident=p_resident)
    return pl.pallas_call(
        kernel,
        out_shape=jax.ShapeDtypeStruct((n_pad, o_pad), jnp.float32),
        grid=(n_pad // tm, n_pad // tk),
        in_specs=[
            pl.BlockSpec((tm, tk), lambda i, k: (i, k)),     # Â row/col tile
            p_spec,                                          # p2 = h1 @ W2
            pl.BlockSpec((1, o_pad), lambda i, k: (0, 0)),   # b2 (resident)
        ],
        out_specs=pl.BlockSpec((tm, o_pad), lambda i, k: (i, 0)),
        compiler_params=pltpu.CompilerParams(
            dimension_semantics=("parallel", "arbitrary"),
            vmem_limit_bytes=vmem_limit,
        ),
    )(a_bf16, p2_bf16, b2_f32)


# ---------------------------------------------------------------------------
# Full forward.
# ---------------------------------------------------------------------------
def gcn_forward(a_hat, x, w1, b1, w2, b2, *, tm_max=1024, tk_max=2048):
    n = a_hat.shape[0]
    in_size = x.shape[1]
    hid = w1.shape[1]
    out_size = w2.shape[1]

    n_pad = _round_up(n, LANE)            # 128-granular padding on both Â axes
    in_pad = _round_up(in_size, LANE)     # lane-dense streamed X
    h_pad = _round_up(hid, LANE)          # 64  -> 128
    o_pad = _round_up(out_size, LANE)     # 4   -> 128
    tm, tk = _pick_tiles(n_pad, tm_max, tk_max)

    # Zero-padding invariant: padded Â rows/cols are zero and padded weight
    # rows/cols are zero, so nonzero padded rows of p2 (= relu(b1) @ W2) never
    # leak into real outputs (padded Â columns kill them), and padded output
    # rows/lanes are sliced away at the end.
    # Â is padded + cast DIRECTLY to bf16 (single materialization); hoist this
    # out of the per-step path if Â is reused across many forward calls.
    b1 = jnp.asarray(b1).reshape(1, -1)
    b2 = jnp.asarray(b2).reshape(1, -1)
    a_p = _pad2d(a_hat, n_pad, n_pad, jnp.bfloat16)
    x_p = _pad2d(x, n_pad, in_pad, jnp.bfloat16)
    w1_p = _pad2d(w1, in_pad, h_pad, jnp.bfloat16)
    b1_p = _pad2d(b1, 1, h_pad, jnp.float32)
    w2_p = _pad2d(w2, h_pad, o_pad, jnp.bfloat16)
    b2_p = _pad2d(b2, 1, o_pad, jnp.float32)

    # Layer 1 (fused): p2 = relu((Â @ X) @ W1 + b1) @ W2
    p2 = layer1_fused(a_p, x_p, w1_p, b1_p, w2_p, tm=tm, tk=tk)

    # Dropout(p=0.8) between layers: identity in eval/inference mode.
    # TODO(synk): training-mode dropout not implemented.

    # Layer 2: out = Â @ p2 + b2
    out_p = layer2_aggregate(a_p, p2, b2_p, tm=tm, tk=tk)
    return out_p[:n, :out_size]


def reference_forward(a_hat, x, w1, b1, w2, b2):
    h1 = jnp.maximum(a_hat @ (x @ w1) + b1, 0.0)
    return a_hat @ (h1 @ w2) + b2


if __name__ == "__main__":
    # Small, deterministic problem: 16 nodes, in_size=8, hidden=64, out_size=4.
    N, IN_SIZE, HID_SIZE, OUT_SIZE = 16, 8, 64, 4

    key = jax.random.PRNGKey(0)
    k_adj, k_x, k_w1, k_b1, k_w2, k_b2 = jax.random.split(key, 6)

    # Symmetric random graph with self-loops, symmetrically normalized.
    rand = jax.random.uniform(k_adj, (N, N))
    adj = (rand + rand.T > 1.2).astype(jnp.float32)
    adj = adj + jnp.eye(N, dtype=jnp.float32)
    adj = jnp.minimum(adj, 1.0)
    deg = jnp.clip(adj.sum(axis=1), 1.0, None)
    d_inv_sqrt = 1.0 / jnp.sqrt(deg)
    a_hat = d_inv_sqrt[:, None] * adj * d_inv_sqrt[None, :]

    # Node features and deterministic parameter init.
    x = jax.random.normal(k_x, (N, IN_SIZE), dtype=jnp.float32)
    w1 = jax.random.normal(k_w1, (IN_SIZE, HID_SIZE), dtype=jnp.float32) / jnp.sqrt(IN_SIZE)
    b1 = 0.01 * jax.random.normal(k_b1, (1, HID_SIZE), dtype=jnp.float32)
    w2 = jax.random.normal(k_w2, (HID_SIZE, OUT_SIZE), dtype=jnp.float32) / jnp.sqrt(HID_SIZE)
    b2 = 0.01 * jax.random.normal(k_b2, (1, OUT_SIZE), dtype=jnp.float32)

    out = gcn_forward(a_hat, x, w1, b1, w2, b2)
    out = jax.block_until_ready(out)

    ref = reference_forward(a_hat, x, w1, b1, w2, b2)
    assert out.shape == (N, OUT_SIZE)
    # bf16 Â / feature matmuls (f32 accumulation) -> loosened tolerance vs f32 ref.
    assert jnp.allclose(out, ref, atol=5e-2, rtol=5e-2), "mismatch vs reference"

    print("KERNEL_OK")
</pallas_src>

<mosaic_0001>
module attributes {stable_mosaic.version = 11 : i64} {
  func.func @_layer1_kernel(%arg0: i32, %arg1: i32, %arg2: memref<128x128xbf16, #tpu.memory_space<vmem>>, %arg3: memref<128x128xbf16, #tpu.memory_space<vmem>>, %arg4: memref<128x128xbf16, #tpu.memory_space<vmem>>, %arg5: memref<1x128xf32, #tpu.memory_space<vmem>>, %arg6: memref<128x128xbf16, #tpu.memory_space<vmem>>, %arg7: memref<128x128xbf16, #tpu.memory_space<vmem>>, %arg8: memref<128x128xf32, #tpu.memory_space<vmem>>) attributes {dimension_semantics = [#tpu.dimension_semantics<parallel>, #tpu.dimension_semantics<arbitrary>], iteration_bounds = array<i64: 1, 1>, scalar_prefetch = 0 : i64, scratch_operands = 1 : i64, tpu.core_type = #tpu.core_type<tc>, window_params = [{transform_indices = @transform_0, window_bounds = array<i64: 128, 128>}, {pipeline_mode = #tpu.pipeline_mode<synchronous>, transform_indices = @transform_1, window_bounds = array<i64: 128, 128>}, {pipeline_mode = #tpu.pipeline_mode<synchronous>, transform_indices = @transform_2, window_bounds = array<i64: 128, 128>}, {pipeline_mode = #tpu.pipeline_mode<synchronous>, transform_indices = @transform_3, window_bounds = array<i64: 1, 128>}, {pipeline_mode = #tpu.pipeline_mode<synchronous>, transform_indices = @transform_4, window_bounds = array<i64: 128, 128>}, {transform_indices = @transform_5, window_bounds = array<i64: 128, 128>}]} {
    %c0_i32 = arith.constant 0 : i32
    %0 = arith.cmpi eq, %arg1, %c0_i32 : i32
    %1 = arith.extui %0 : i1 to i32
    %c0_i32_0 = arith.constant 0 : i32
    %2 = arith.cmpi ne, %1, %c0_i32_0 : i32
    scf.if %2 {
      %cst_9 = arith.constant 0.000000e+00 : f32
      %15 = vector.broadcast %cst_9 : f32 to vector<128x128xf32>
      %c0_10 = arith.constant 0 : index
      %c0_11 = arith.constant 0 : index
      %16 = vector.load %arg8[%c0_10, %c0_11] : memref<128x128xf32, #tpu.memory_space<vmem>>, vector<128x128xf32>
      tpu.vector_store %arg8[%c0_10, %c0_11], %15 {strides = array<i32>} : memref<128x128xf32, #tpu.memory_space<vmem>>, vector<128x128xf32>,
    } else {
    }
    %c128_i32 = arith.constant 128 : i32
    %3 = arith.muli %arg1, %c128_i32 : i32
    %4 = tpu.assume_multiple %3, 128 : i32
    %5 = arith.index_cast %4 : i32 to index
    %c0 = arith.constant 0 : index
    %6 = vector.load %arg3[%5, %c0] : memref<128x128xbf16, #tpu.memory_space<vmem>>, vector<128x128xbf16>
    %c0_1 = arith.constant 0 : index
    %c0_2 = arith.constant 0 : index
    %7 = vector.load %arg8[%c0_1, %c0_2] : memref<128x128xf32, #tpu.memory_space<vmem>>, vector<128x128xf32>
    %c0_3 = arith.constant 0 : index
    %c0_4 = arith.constant 0 : index
    %8 = vector.load %arg2[%c0_3, %c0_4] : memref<128x128xbf16, #tpu.memory_space<vmem>>, vector<128x128xbf16>
    %cst = arith.constant dense<0.000000e+00> : vector<128x128xf32>
    %9 = tpu.matmul %8, %6, %cst {dimension_numbers = #tpu.dot_dimension_numbers<[1], [0], [0], [1], [0, 0, 1, 1], [], []>} : vector<128x128xbf16>, vector<128x128xbf16>, vector<128x128xf32> -> vector<128x128xf32>
    %10 = arith.addf %7, %9 : vector<128x128xf32>
    %c0_5 = arith.constant 0 : index
    %c0_6 = arith.constant 0 : index
    %11 = vector.load %arg8[%c0_5, %c0_6] : memref<128x128xf32, #tpu.memory_space<vmem>>, vector<128x128xf32>
    tpu.vector_store %arg8[%c0_5, %c0_6], %10 {strides = array<i32>} : memref<128x128xf32, #tpu.memory_space<vmem>>, vector<128x128xf32>,
    %c0_i32_7 = arith.constant 0 : i32
    %12 = arith.cmpi eq, %arg1, %c0_i32_7 : i32
    %13 = arith.extui %12 : i1 to i32
    %c0_i32_8 = arith.constant 0 : i32
    %14 = arith.cmpi ne, %13, %c0_i32_8 : i32
    scf.if %14 {
      %c0_9 = arith.constant 0 : index
      %c0_10 = arith.constant 0 : index
      %15 = vector.load %arg8[%c0_9, %c0_10] : memref<128x128xf32, #tpu.memory_space<vmem>>, vector<128x128xf32>
      %16 = arith.truncf %15 : vector<128x128xf32> to vector<128x128xbf16>
      %c0_11 = arith.constant 0 : index
      %c0_12 = arith.constant 0 : index
      %17 = vector.load %arg4[%c0_11, %c0_12] : memref<128x128xbf16, #tpu.memory_space<vmem>>, vector<128x128xbf16>
      %cst_13 = arith.constant dense<0.000000e+00> : vector<128x128xf32>
      %18 = tpu.matmul %16, %17, %cst_13 {dimension_numbers = #tpu.dot_dimension_numbers<[1], [0], [0], [1], [0, 0, 1, 1], [], []>} : vector<128x128xbf16>, vector<128x128xbf16>, vector<128x128xf32> -> vector<128x128xf32>
      %c0_14 = arith.constant 0 : index
      %c0_15 = arith.constant 0 : index
      %19 = vector.load %arg5[%c0_14, %c0_15] : memref<1x128xf32, #tpu.memory_space<vmem>>, vector<1x128xf32>
      %20 = vector.broadcast %19 : vector<1x128xf32> to vector<128x128xf32>
      %21 = arith.addf %18, %20 : vector<128x128xf32>
      %cst_16 = arith.constant 0.000000e+00 : f32
      %22 = vector.broadcast %cst_16 : f32 to vector<128x128xf32>
      %23 = arith.maximumf %21, %22 : vector<128x128xf32>
      %24 = arith.truncf %23 : vector<128x128xf32> to vector<128x128xbf16>
      %c0_17 = arith.constant 0 : index
      %c0_18 = arith.constant 0 : index
      %25 = vector.load %arg6[%c0_17, %c0_18] : memref<128x128xbf16, #tpu.memory_space<vmem>>, vector<128x128xbf16>
      %cst_19 = arith.constant dense<0.000000e+00> : vector<128x128xf32>
      %26 = tpu.matmul %24, %25, %cst_19 {dimension_numbers = #tpu.dot_dimension_numbers<[1], [0], [0], [1], [0, 0, 1, 1], [], []>} : vector<128x128xbf16>, vector<128x128xbf16>, vector<128x128xf32> -> vector<128x128xf32>
      %27 = arith.truncf %26 : vector<128x128xf32> to vector<128x128xbf16>
      %c0_20 = arith.constant 0 : index
      %c0_21 = arith.constant 0 : index
      %28 = vector.load %arg7[%c0_20, %c0_21] : memref<128x128xbf16, #tpu.memory_space<vmem>>, vector<128x128xbf16>
      tpu.vector_store %arg7[%c0_20, %c0_21], %27 {strides = array<i32>} : memref<128x128xbf16, #tpu.memory_space<vmem>>, vector<128x128xbf16>,
    } else {
    }
    return
  }
  func.func @transform_0(%arg0: i32, %arg1: i32) -> (i32, i32) {
    %c0_i32 = arith.constant 0 : i32
    return %arg0, %arg1 : i32, i32
  }
  func.func @transform_1(%arg0: i32, %arg1: i32) -> (i32, i32) {
    %c0_i32 = arith.constant 0 : i32
    %c0_i32_0 = arith.constant 0 : i32
    %c0_i32_1 = arith.constant 0 : i32
    return %c0_i32, %c0_i32_0 : i32, i32
  }
  func.func @transform_2(%arg0: i32, %arg1: i32) -> (i32, i32) {
    %c0_i32 = arith.constant 0 : i32
    %c0_i32_0 = arith.constant 0 : i32
    %c0_i32_1 = arith.constant 0 : i32
    return %c0_i32, %c0_i32_0 : i32, i32
  }
  func.func @transform_3(%arg0: i32, %arg1: i32) -> (i32, i32) {
    %c0_i32 = arith.constant 0 : i32
    %c0_i32_0 = arith.constant 0 : i32
    %c0_i32_1 = arith.constant 0 : i32
    return %c0_i32, %c0_i32_0 : i32, i32
  }
  func.func @transform_4(%arg0: i32, %arg1: i32) -> (i32, i32) {
    %c0_i32 = arith.constant 0 : i32
    %c0_i32_0 = arith.constant 0 : i32
    %c0_i32_1 = arith.constant 0 : i32
    return %c0_i32, %c0_i32_0 : i32, i32
  }
  func.func @transform_5(%arg0: i32, %arg1: i32) -> (i32, i32) {
    %c0_i32 = arith.constant 0 : i32
    %c0_i32_0 = arith.constant 0 : i32
    return %arg0, %c0_i32 : i32, i32
  }
}

</mosaic_0001>

<llo_original>
// kernel: tpu_custom_call.1
$region0: #{tpu_custom_call.1}
  #allocation0 [shape = 'u32[]', space=smem, size = 0x4, offset = 0x4, fixed_abs, tag = 'smem constant byte address 0x4 - core index']
  #allocation1 [shape = 'u32[72,128]{1,0:T(1,128)}', space=vmem, size = 0x9000, scoped, tag = 'internal scratch']
  #allocation2 [shape = 'f32[128,128]{1,0:T(8,128)}', space=vmem, size = 0x10000, scoped, tag = 'scratch operand']
  %s0 = inlined_call_operand.hbm [shape: bf16[128,128], index: 0, kind: input, shape index: {}]
  %s1 = inlined_call_operand.hbm [shape: bf16[128,128], index: 1, kind: input, shape index: {}]
  %s2 = inlined_call_operand.hbm [shape: bf16[128,128], index: 2, kind: input, shape index: {}]
  %s3 = inlined_call_operand.vmem [shape: f32[1,128], index: 3, kind: input, shape index: {}]
  %s4 = inlined_call_operand.hbm [shape: bf16[128,128], index: 4, kind: input, shape index: {}]
  %s5 = inlined_call_operand.hbm [shape: bf16[128,128], index: 5, kind: output, shape index: {}]
  %s6 = sld [smem:[#allocation0]]
  $region54: #{tpu_custom_call.1} parent=0
    _
  %s8 = ssub.s32 1, %s6
  %s9 = scalar_select 0, %s8, %s6
  $region1: #{tpu_custom_call.1} parent=0
    #allocation3 [shape = 'u8[32768]{0}', space=vmem, size = 0x8000, scoped, tag = 'input window, operand 0, single buffered']
    #allocation4 [shape = 's32[1]{0}', space=sflag, size = 0x4, scoped, tag = 'scoped memory for tpu_custom_call.1']
    #allocation5 [shape = 's32[1]{0}', space=sflag, size = 0x4, scoped, tag = 'scoped memory for tpu_custom_call.1']
    #allocation6 [shape = 'u8[32768]{0}', space=vmem, size = 0x8000, scoped, tag = 'input window, operand 1, single buffered']
    #allocation7 [shape = 's32[1]{0}', space=sflag, size = 0x4, scoped, tag = 'scoped memory for tpu_custom_call.1']
    #allocation8 [shape = 'u8[32768]{0}', space=vmem, size = 0x8000, scoped, tag = 'input window, operand 2, single buffered']
    #allocation9 [shape = 'u8[32768]{0}', space=vmem, size = 0x8000, scoped, tag = 'input window, operand 4, single buffered']
    #allocation10 [shape = 's32[1]{0}', space=sflag, size = 0x4, scoped, tag = 'scoped memory for tpu_custom_call.1']
    #allocation11 [shape = 'u8[32768]{0}', space=vmem, size = 0x8000, scoped, tag = 'output window, operand 0, single buffered']
    %10 = vsyncpa [#allocation4], 0
    %11 = vsyncpa [#allocation7], 0
    %12 = vsyncpa [#allocation10], 0
    %13 = vsyncpa [#allocation5], 0
    // Predicated region
    $region2: #{tpu_custom_call.1} parent=1 // pred_check
      _
    $region3: #{tpu_custom_call.1} parent=1 // pred_check_branch
      %15 = sbr.rel (0) target = $region5
    $region4: #{tpu_custom_call.1} parent=1 // pred_region
      %17 = vsyncadd [#allocation4], 0
      %s18 = sshll.u32 %s0, 4
      %s19 = int_to_ptr.hbm [resolvable:$true] %s18
      %s20 = sshll.u32 [#allocation3], 4
      %s21 = int_to_ptr.vmem [resolvable:$true] %s20
      %26 = dma.hbm_to_vmem [thread:$0]  %s19, 1024, %s21, [#allocation4], 64, 64, 4
    $region5: #{tpu_custom_call.1} parent=1 // pred_fallthru
      _
    // Predicated region
    $region6: #{tpu_custom_call.1} parent=1 // pred_check
      _
    $region7: #{tpu_custom_call.1} parent=1 // pred_check_branch
      %28 = sbr.rel (0) target = $region9
    $region8: #{tpu_custom_call.1} parent=1 // pred_region
      %30 = vsyncadd [#allocation7], 0
      %s31 = sshll.u32 %s1, 4
      %s32 = int_to_ptr.hbm [resolvable:$true] %s31
      %s33 = sshll.u32 [#allocation6], 4
      %s34 = int_to_ptr.vmem [resolvable:$true] %s33
      %39 = dma.hbm_to_vmem [thread:$0]  %s32, 1024, %s34, [#allocation7], 64, 64, 4
    $region9: #{tpu_custom_call.1} parent=1 // pred_fallthru
      _
    // Predicated region
    $region10: #{tpu_custom_call.1} parent=1 // pred_check
      _
    $region11: #{tpu_custom_call.1} parent=1 // pred_check_branch
      %41 = sbr.rel (0) target = $region13
    $region12: #{tpu_custom_call.1} parent=1 // pred_region
      %43 = vsyncadd [#allocation7], 0
      %s44 = sshll.u32 %s2, 4
      %s45 = int_to_ptr.hbm [resolvable:$true] %s44
      %s46 = sshll.u32 [#allocation8], 4
      %s47 = int_to_ptr.vmem [resolvable:$true] %s46
      %52 = dma.hbm_to_vmem [thread:$0]  %s45, 1024, %s47, [#allocation7], 64, 64, 4
    $region13: #{tpu_custom_call.1} parent=1 // pred_fallthru
      _
    // Predicated region
    $region14: #{tpu_custom_call.1} parent=1 // pred_check
      _
    $region15: #{tpu_custom_call.1} parent=1 // pred_check_branch
      %54 = sbr.rel (0) target = $region17
    $region16: #{tpu_custom_call.1} parent=1 // pred_region
      _
    $region17: #{tpu_custom_call.1} parent=1 // pred_fallthru
      _
    // Predicated region
    $region18: #{tpu_custom_call.1} parent=1 // pred_check
      _
    $region19: #{tpu_custom_call.1} parent=1 // pred_check_branch
      %56 = sbr.rel (0) target = $region21
    $region20: #{tpu_custom_call.1} parent=1 // pred_region
      %58 = vsyncadd [#allocation10], 0
      %s59 = sshll.u32 %s4, 4
      %s60 = int_to_ptr.hbm [resolvable:$true] %s59
      %s61 = sshll.u32 [#allocation9], 4
      %s62 = int_to_ptr.vmem [resolvable:$true] %s61
      %67 = dma.hbm_to_vmem [thread:$0]  %s60, 1024, %s62, [#allocation10], 64, 64, 4
    $region21: #{tpu_custom_call.1} parent=1 // pred_fallthru
      _
    // Predicated region
    $region22: #{tpu_custom_call.1} parent=1 // pred_check
      _
    $region23: #{tpu_custom_call.1} parent=1 // pred_check_branch
      %69 = sbr.rel (0) target = $region25
    $region24: #{tpu_custom_call.1} parent=1 // pred_region
      %71 = dma.done [#allocation4], 1024
    $region25: #{tpu_custom_call.1} parent=1 // pred_fallthru
      _
    // Predicated region
    $region26: #{tpu_custom_call.1} parent=1 // pred_check
      _
    $region27: #{tpu_custom_call.1} parent=1 // pred_check_branch
      %73 = sbr.rel (0) target = $region29
    $region28: #{tpu_custom_call.1} parent=1 // pred_region
      %75 = dma.done [#allocation7], 1024
    $region29: #{tpu_custom_call.1} parent=1 // pred_fallthru
      _
    // Predicated region
    $region30: #{tpu_custom_call.1} parent=1 // pred_check
      _
    $region31: #{tpu_custom_call.1} parent=1 // pred_check_branch
      %77 = sbr.rel (0) target = $region33
    $region32: #{tpu_custom_call.1} parent=1 // pred_region
      %79 = dma.done [#allocation7], 1024
    $region33: #{tpu_custom_call.1} parent=1 // pred_fallthru
      _
    // Predicated region
    $region34: #{tpu_custom_call.1} parent=1 // pred_check
      _
    $region35: #{tpu_custom_call.1} parent=1 // pred_check_branch
      %81 = sbr.rel (0) target = $region37
    $region36: #{tpu_custom_call.1} parent=1 // pred_region
      %83 = dma.done [#allocation10], 1024
    $region37: #{tpu_custom_call.1} parent=1 // pred_fallthru
      _
    %p84 = scmp.eq.s32.totalorder 0, 0
    // Predicated region
    $region38: #{tpu_custom_call.1} parent=1 // pred_check
      %p85 = pneg %p84
    $region39: #{tpu_custom_call.1} parent=1 // pred_check_branch
      %87 = sbr.rel (%p85) target = $region41
    $region40: #{tpu_custom_call.1} parent=1 // pred_region
      %88 = vst [vmem:[#allocation2] sm:$0xff] 0.0
      %89 = vst [vmem:[#allocation2 + $0x8] sm:$0xff] 0.0
      %90 = vst [vmem:[#allocation2 + $0x10] sm:$0xff] 0.0
      %91 = vst [vmem:[#allocation2 + $0x18] sm:$0xff] 0.0
      %92 = vst [vmem:[#allocation2 + $0x20] sm:$0xff] 0.0
      %93 = vst [vmem:[#allocation2 + $0x28] sm:$0xff] 0.0
      %94 = vst [vmem:[#allocation2 + $0x30] sm:$0xff] 0.0
      %95 = vst [vmem:[#allocation2 + $0x38] sm:$0xff] 0.0
      %96 = vst [vmem:[#allocation2 + $0x40] sm:$0xff] 0.0
      %97 = vst [vmem:[#allocation2 + $0x48] sm:$0xff] 0.0
      %98 = vst [vmem:[#allocation2 + $0x50] sm:$0xff] 0.0
      %99 = vst [vmem:[#allocation2 + $0x58] sm:$0xff] 0.0
      %100 = vst [vmem:[#allocation2 + $0x60] sm:$0xff] 0.0
      %101 = vst [vmem:[#allocation2 + $0x68] sm:$0xff] 0.0
      %102 = vst [vmem:[#allocation2 + $0x70] sm:$0xff] 0.0
      %103 = vst [vmem:[#allocation2 + $0x78] sm:$0xff] 0.0
    $region41: #{tpu_custom_call.1} parent=1 // pred_fallthru
      _
    %s104 = smul.u32 0, 128
    %s105 = sshra.s32 %s104, 3
    %s106 = sand.u32 %s104, 7
    %s107 = smul.addr %s105, 4
    %s108 = scalar_lea.vmem [#allocation6], %s107
    %v109 = vld [vmem:[%s108] sm:$0xf]
    %v110 = vld [vmem:[%s108 + $0x4] sm:$0xf]
    %v111 = vld [vmem:[%s108 + $0x8] sm:$0xf]
    %v112 = vld [vmem:[%s108 + $0xc] sm:$0xf]
    %v113 = vld [vmem:[%s108 + $0x10] sm:$0xf]
    %v114 = vld [vmem:[%s108 + $0x14] sm:$0xf]
    %v115 = vld [vmem:[%s108 + $0x18] sm:$0xf]
    %v116 = vld [vmem:[%s108 + $0x1c] sm:$0xf]
    %v117 = vld [vmem:[%s108 + $0x20] sm:$0xf]
    %v118 = vld [vmem:[%s108 + $0x24] sm:$0xf]
    %v119 = vld [vmem:[%s108 + $0x28] sm:$0xf]
    %v120 = vld [vmem:[%s108 + $0x2c] sm:$0xf]
    %v121 = vld [vmem:[%s108 + $0x30] sm:$0xf]
    %v122 = vld [vmem:[%s108 + $0x34] sm:$0xf]
    %v123 = vld [vmem:[%s108 + $0x38] sm:$0xf]
    %v124 = vld [vmem:[%s108 + $0x3c] sm:$0xf]
    %v125 = vld [vmem:[#allocation2] sm:$0xff]
    %v126 = vld [vmem:[#allocation2 + $0x8] sm:$0xff]
    %v127 = vld [vmem:[#allocation2 + $0x10] sm:$0xff]
    %v128 = vld [vmem:[#allocation2 + $0x18] sm:$0xff]
    %v129 = vld [vmem:[#allocation2 + $0x20] sm:$0xff]
    %v130 = vld [vmem:[#allocation2 + $0x28] sm:$0xff]
    %v131 = vld [vmem:[#allocation2 + $0x30] sm:$0xff]
    %v132 = vld [vmem:[#allocation2 + $0x38] sm:$0xff]
    %v133 = vld [vmem:[#allocation2 + $0x40] sm:$0xff]
    %v134 = vld [vmem:[#allocation2 + $0x48] sm:$0xff]
    %v135 = vld [vmem:[#allocation2 + $0x50] sm:$0xff]
    %v136 = vld [vmem:[#allocation2 + $0x58] sm:$0xff]
    %v137 = vld [vmem:[#allocation2 + $0x60] sm:$0xff]
    %v138 = vld [vmem:[#allocation2 + $0x68] sm:$0xff]
    %v139 = vld [vmem:[#allocation2 + $0x70] sm:$0xff]
    %v140 = vld [vmem:[#allocation2 + $0x78] sm:$0xff]
    %v141 = vld [vmem:[#allocation3] sm:$0xf]
    %v142 = vld [vmem:[#allocation3 + $0x4] sm:$0xf]
    %v143 = vld [vmem:[#allocation3 + $0x8] sm:$0xf]
    %v144 = vld [vmem:[#allocation3 + $0xc] sm:$0xf]
    %v145 = vld [vmem:[#allocation3 + $0x10] sm:$0xf]
    %v146 = vld [vmem:[#allocation3 + $0x14] sm:$0xf]
    %v147 = vld [vmem:[#allocation3 + $0x18] sm:$0xf]
    %v148 = vld [vmem:[#allocation3 + $0x1c] sm:$0xf]
    %v149 = vld [vmem:[#allocation3 + $0x20] sm:$0xf]
    %v150 = vld [vmem:[#allocation3 + $0x24] sm:$0xf]
    %v151 = vld [vmem:[#allocation3 + $0x28] sm:$0xf]
    %v152 = vld [vmem:[#allocation3 + $0x2c] sm:$0xf]
    %v153 = vld [vmem:[#allocation3 + $0x30] sm:$0xf]
    %v154 = vld [vmem:[#allocation3 + $0x34] sm:$0xf]
    %v155 = vld [vmem:[#allocation3 + $0x38] sm:$0xf]
    %v156 = vld [vmem:[#allocation3 + $0x3c] sm:$0xf]
    %v173 = vunpack.c.l.b16 %v141
    %v174 = vunpack.c.l.b16 %v142
    %v175 = vunpack.c.l.b16 %v143
    %v176 = vunpack.c.l.b16 %v144
    %v177 = vunpack.c.l.b16 %v145
    %v178 = vunpack.c.l.b16 %v146
    %v179 = vunpack.c.l.b16 %v147
    %v180 = vunpack.c.l.b16 %v148
    %v181 = vunpack.c.l.b16 %v149
    %v182 = vunpack.c.l.b16 %v150
    %v183 = vunpack.c.l.b16 %v151
    %v184 = vunpack.c.l.b16 %v152
    %v185 = vunpack.c.l.b16 %v153
    %v186 = vunpack.c.l.b16 %v154
    %v187 = vunpack.c.l.b16 %v155
    %v188 = vunpack.c.l.b16 %v156
    %v189 = vpack.c.b16 %v174, %v173
    %v190 = vpack.c.b16 %v176, %v175
    %v191 = vpack.c.b16 %v178, %v177
    %v192 = vpack.c.b16 %v180, %v179
    %v193 = vpack.c.b16 %v182, %v181
    %v194 = vpack.c.b16 %v184, %v183
    %v195 = vpack.c.b16 %v186, %v185
    %v196 = vpack.c.b16 %v188, %v187
    %v221 = vunpack.c.l.b16 %v109
    %v222 = vunpack.c.l.b16 %v110
    %v223 = vunpack.c.l.b16 %v111
    %v224 = vunpack.c.l.b16 %v112
    %v225 = vunpack.c.l.b16 %v113
    %v226 = vunpack.c.l.b16 %v114
    %v227 = vunpack.c.l.b16 %v115
    %v228 = vunpack.c.l.b16 %v116
    %v229 = vunpack.c.l.b16 %v117
    %v230 = vunpack.c.l.b16 %v118
    %v231 = vunpack.c.l.b16 %v119
    %v232 = vunpack.c.l.b16 %v120
    %v233 = vunpack.c.l.b16 %v121
    %v234 = vunpack.c.l.b16 %v122
    %v235 = vunpack.c.l.b16 %v123
    %v236 = vunpack.c.l.b16 %v124
    %v237 = vpack.c.b16 %v222, %v221
    %v238 = vpack.c.b16 %v224, %v223
    %v239 = vpack.c.b16 %v226, %v225
    %v240 = vpack.c.b16 %v228, %v227
    %v241 = vpack.c.b16 %v230, %v229
    %v242 = vpack.c.b16 %v232, %v231
    %v243 = vpack.c.b16 %v234, %v233
    %v244 = vpack.c.b16 %v236, %v235
    %253 = vmatpush.bf16.msra.mxu0 %v244
    %254 = vmatpush.bf16.msra.mxu0 %v243
    %255 = vmatpush.bf16.msra.mxu0 %v242
    %256 = vmatpush.bf16.msra.mxu0 %v241
    %257 = vmatpush.bf16.msra.mxu0 %v240
    %258 = vmatpush.bf16.msra.mxu0 %v239
    %259 = vmatpush.bf16.msra.mxu0 %v238
    %260 = vmatpush.bf16.msra.mxu0 %v237
    %261 = vmatmul.bf16.gmra.mxu0 %v189
    %v262 = vpop.f32.mrf.mxu0
    %v263 = vadd.f32 0.0, %v262
    %v264 = vpop.f32.mrf.mxu0
    %v265 = vadd.f32 0.0, %v264
    %266 = vmatmul.bf16.gmra.mxu0 %v190
    %v267 = vpop.f32.mrf.mxu0
    %v268 = vadd.f32 0.0, %v267
    %v269 = vpop.f32.mrf.mxu0
    %v270 = vadd.f32 0.0, %v269
    %271 = vmatmul.bf16.gmra.mxu0 %v191
    %v272 = vpop.f32.mrf.mxu0
    %v273 = vadd.f32 0.0, %v272
    %v274 = vpop.f32.mrf.mxu0
    %v275 = vadd.f32 0.0, %v274
    %276 = vmatmul.bf16.gmra.mxu0 %v192
    %v277 = vpop.f32.mrf.mxu0
    %v278 = vadd.f32 0.0, %v277
    %v279 = vpop.f32.mrf.mxu0
    %v280 = vadd.f32 0.0, %v279
    %281 = vmatmul.bf16.gmra.mxu0 %v193
    %v282 = vpop.f32.mrf.mxu0
    %v283 = vadd.f32 0.0, %v282
    %v284 = vpop.f32.mrf.mxu0
    %v285 = vadd.f32 0.0, %v284
    %286 = vmatmul.bf16.gmra.mxu0 %v194
    %v287 = vpop.f32.mrf.mxu0
    %v288 = vadd.f32 0.0, %v287
    %v289 = vpop.f32.mrf.mxu0
    %v290 = vadd.f32 0.0, %v289
    %291 = vmatmul.bf16.gmra.mxu0 %v195
    %v292 = vpop.f32.mrf.mxu0
    %v293 = vadd.f32 0.0, %v292
    %v294 = vpop.f32.mrf.mxu0
    %v295 = vadd.f32 0.0, %v294
    %296 = vmatmul.bf16.gmra.mxu0 %v196
    %v297 = vpop.f32.mrf.mxu0
    %v298 = vadd.f32 0.0, %v297
    %v299 = vpop.f32.mrf.mxu0
    %v300 = vadd.f32 0.0, %v299
    %301 = vdwg.mxu0
    %v302 = vadd.f32 %v125, %v263
    %v303 = vadd.f32 %v126, %v265
    %v304 = vadd.f32 %v127, %v268
    %v305 = vadd.f32 %v128, %v270
    %v306 = vadd.f32 %v129, %v273
    %v307 = vadd.f32 %v130, %v275
    %v308 = vadd.f32 %v131, %v278
    %v309 = vadd.f32 %v132, %v280
    %v310 = vadd.f32 %v133, %v283
    %v311 = vadd.f32 %v134, %v285
    %v312 = vadd.f32 %v135, %v288
    %v313 = vadd.f32 %v136, %v290
    %v314 = vadd.f32 %v137, %v293
    %v315 = vadd.f32 %v138, %v295
    %v316 = vadd.f32 %v139, %v298
    %v317 = vadd.f32 %v140, %v300
    %318 = vst [vmem:[#allocation2] sm:$0xff] %v302
    %319 = vst [vmem:[#allocation2 + $0x8] sm:$0xff] %v303
    %320 = vst [vmem:[#allocation2 + $0x10] sm:$0xff] %v304
    %321 = vst [vmem:[#allocation2 + $0x18] sm:$0xff] %v305
    %322 = vst [vmem:[#allocation2 + $0x20] sm:$0xff] %v306
    %323 = vst [vmem:[#allocation2 + $0x28] sm:$0xff] %v307
    %324 = vst [vmem:[#allocation2 + $0x30] sm:$0xff] %v308
    %325 = vst [vmem:[#allocation2 + $0x38] sm:$0xff] %v309
    %326 = vst [vmem:[#allocation2 + $0x40] sm:$0xff] %v310
    %327 = vst [vmem:[#allocation2 + $0x48] sm:$0xff] %v311
    %328 = vst [vmem:[#allocation2 + $0x50] sm:$0xff] %v312
    %329 = vst [vmem:[#allocation2 + $0x58] sm:$0xff] %v313
    %330 = vst [vmem:[#allocation2 + $0x60] sm:$0xff] %v314
    %331 = vst [vmem:[#allocation2 + $0x68] sm:$0xff] %v315
    %332 = vst [vmem:[#allocation2 + $0x70] sm:$0xff] %v316
    %333 = vst [vmem:[#allocation2 + $0x78] sm:$0xff] %v317
    // Predicated region
    $region42: #{tpu_custom_call.1} parent=1 // pred_check
      %p334 = pneg %p84
    $region43: #{tpu_custom_call.1} parent=1 // pred_check_branch
      %336 = sbr.rel (%p334) target = $region45
    $region44: #{tpu_custom_call.1} parent=1 // pred_region
      %v337 = vld [vmem:[#allocation2] sm:$0xff]
      %v338 = vld [vmem:[#allocation2 + $0x8] sm:$0xff]
      %v339 = vld [vmem:[#allocation2 + $0x10] sm:$0xff]
      %v340 = vld [vmem:[#allocation2 + $0x18] sm:$0xff]
      %v341 = vld [vmem:[#allocation2 + $0x20] sm:$0xff]
      %v342 = vld [vmem:[#allocation2 + $0x28] sm:$0xff]
      %v343 = vld [vmem:[#allocation2 + $0x30] sm:$0xff]
      %v344 = vld [vmem:[#allocation2 + $0x38] sm:$0xff]
      %v345 = vld [vmem:[#allocation2 + $0x40] sm:$0xff]
      %v346 = vld [vmem:[#allocation2 + $0x48] sm:$0xff]
      %v347 = vld [vmem:[#allocation2 + $0x50] sm:$0xff]
      %v348 = vld [vmem:[#allocation2 + $0x58] sm:$0xff]
      %v349 = vld [vmem:[#allocation2 + $0x60] sm:$0xff]
      %v350 = vld [vmem:[#allocation2 + $0x68] sm:$0xff]
      %v351 = vld [vmem:[#allocation2 + $0x70] sm:$0xff]
      %v352 = vld [vmem:[#allocation2 + $0x78] sm:$0xff]
      %v353 = vpack.c.bf16 %v338, %v337
      %v354 = vpack.c.bf16 %v340, %v339
      %v355 = vpack.c.bf16 %v342, %v341
      %v356 = vpack.c.bf16 %v344, %v343
      %v357 = vpack.c.bf16 %v346, %v345
      %v358 = vpack.c.bf16 %v348, %v347
      %v359 = vpack.c.bf16 %v350, %v349
      %v360 = vpack.c.bf16 %v352, %v351
      %v361 = vld [vmem:[#allocation8] sm:$0xf]
      %v362 = vld [vmem:[#allocation8 + $0x4] sm:$0xf]
      %v363 = vld [vmem:[#allocation8 + $0x8] sm:$0xf]
      %v364 = vld [vmem:[#allocation8 + $0xc] sm:$0xf]
      %v365 = vld [vmem:[#allocation8 + $0x10] sm:$0xf]
      %v366 = vld [vmem:[#allocation8 + $0x14] sm:$0xf]
      %v367 = vld [vmem:[#allocation8 + $0x18] sm:$0xf]
      %v368 = vld [vmem:[#allocation8 + $0x1c] sm:$0xf]
      %v369 = vld [vmem:[#allocation8 + $0x20] sm:$0xf]
      %v370 = vld [vmem:[#allocation8 + $0x24] sm:$0xf]
      %v371 = vld [vmem:[#allocation8 + $0x28] sm:$0xf]
      %v372 = vld [vmem:[#allocation8 + $0x2c] sm:$0xf]
      %v373 = vld [vmem:[#allocation8 + $0x30] sm:$0xf]
      %v374 = vld [vmem:[#allocation8 + $0x34] sm:$0xf]
      %v375 = vld [vmem:[#allocation8 + $0x38] sm:$0xf]
      %v376 = vld [vmem:[#allocation8 + $0x3c] sm:$0xf]
      %v377 = vld [vmem:[%s3] sm:$0x1]
      %v379 = vperm.slane %v377, 0
      %v397 = vunpack.c.l.b16 %v361
      %v398 = vunpack.c.l.b16 %v362
      %v399 = vunpack.c.l.b16 %v363
      %v400 = vunpack.c.l.b16 %v364
      %v401 = vunpack.c.l.b16 %v365
      %v402 = vunpack.c.l.b16 %v366
      %v403 = vunpack.c.l.b16 %v367
      %v404 = vunpack.c.l.b16 %v368
      %v405 = vunpack.c.l.b16 %v369
      %v406 = vunpack.c.l.b16 %v370
      %v407 = vunpack.c.l.b16 %v371
      %v408 = vunpack.c.l.b16 %v372
      %v409 = vunpack.c.l.b16 %v373
      %v410 = vunpack.c.l.b16 %v374
      %v411 = vunpack.c.l.b16 %v375
      %v412 = vunpack.c.l.b16 %v376
      %v413 = vpack.c.b16 %v398, %v397
      %v414 = vpack.c.b16 %v400, %v399
      %v415 = vpack.c.b16 %v402, %v401
      %v416 = vpack.c.b16 %v404, %v403
      %v417 = vpack.c.b16 %v406, %v405
      %v418 = vpack.c.b16 %v408, %v407
      %v419 = vpack.c.b16 %v410, %v409
      %v420 = vpack.c.b16 %v412, %v411
      %429 = vmatpush.bf16.msra.mxu0 %v420
      %430 = vmatpush.bf16.msra.mxu0 %v419
      %431 = vmatpush.bf16.msra.mxu0 %v418
      %432 = vmatpush.bf16.msra.mxu0 %v417
      %433 = vmatpush.bf16.msra.mxu0 %v416
      %434 = vmatpush.bf16.msra.mxu0 %v415
      %435 = vmatpush.bf16.msra.mxu0 %v414
      %436 = vmatpush.bf16.msra.mxu0 %v413
      %437 = vmatmul.bf16.gmra.mxu0 %v353
      %v438 = vpop.f32.mrf.mxu0
      %v439 = vadd.f32 %v379, %v438
      %v440 = vpop.f32.mrf.mxu0
      %v441 = vadd.f32 %v379, %v440
      %442 = vmatmul.bf16.gmra.mxu0 %v354
      %v443 = vpop.f32.mrf.mxu0
      %v444 = vadd.f32 %v379, %v443
      %v445 = vpop.f32.mrf.mxu0
      %v446 = vadd.f32 %v379, %v445
      %447 = vmatmul.bf16.gmra.mxu0 %v355
      %v448 = vpop.f32.mrf.mxu0
      %v449 = vadd.f32 %v379, %v448
      %v450 = vpop.f32.mrf.mxu0
      %v451 = vadd.f32 %v379, %v450
      %452 = vmatmul.bf16.gmra.mxu0 %v356
      %v453 = vpop.f32.mrf.mxu0
      %v454 = vadd.f32 %v379, %v453
      %v455 = vpop.f32.mrf.mxu0
      %v456 = vadd.f32 %v379, %v455
      %457 = vmatmul.bf16.gmra.mxu0 %v357
      %v458 = vpop.f32.mrf.mxu0
      %v459 = vadd.f32 %v379, %v458
      %v460 = vpop.f32.mrf.mxu0
      %v461 = vadd.f32 %v379, %v460
      %462 = vmatmul.bf16.gmra.mxu0 %v358
      %v463 = vpop.f32.mrf.mxu0
      %v464 = vadd.f32 %v379, %v463
      %v465 = vpop.f32.mrf.mxu0
      %v466 = vadd.f32 %v379, %v465
      %467 = vmatmul.bf16.gmra.mxu0 %v359
      %v468 = vpop.f32.mrf.mxu0
      %v469 = vadd.f32 %v379, %v468
      %v470 = vpop.f32.mrf.mxu0
      %v471 = vadd.f32 %v379, %v470
      %472 = vmatmul.bf16.gmra.mxu0 %v360
      %v473 = vpop.f32.mrf.mxu0
      %v474 = vadd.f32 %v379, %v473
      %v475 = vpop.f32.mrf.mxu0
      %v476 = vadd.f32 %v379, %v475
      %477 = vdwg.mxu0
      %v478 = vmax.f32 %v439, 0.0
      %v479 = vmax.f32 %v441, 0.0
      %v480 = vmax.f32 %v444, 0.0
      %v481 = vmax.f32 %v446, 0.0
      %v482 = vmax.f32 %v449, 0.0
      %v483 = vmax.f32 %v451, 0.0
      %v484 = vmax.f32 %v454, 0.0
      %v485 = vmax.f32 %v456, 0.0
      %v486 = vmax.f32 %v459, 0.0
      %v487 = vmax.f32 %v461, 0.0
      %v488 = vmax.f32 %v464, 0.0
      %v489 = vmax.f32 %v466, 0.0
      %v490 = vmax.f32 %v469, 0.0
      %v491 = vmax.f32 %v471, 0.0
      %v492 = vmax.f32 %v474, 0.0
      %v493 = vmax.f32 %v476, 0.0
      %v494 = vpack.c.bf16 %v479, %v478
      %v495 = vpack.c.bf16 %v481, %v480
      %v496 = vpack.c.bf16 %v483, %v482
      %v497 = vpack.c.bf16 %v485, %v484
      %v498 = vpack.c.bf16 %v487, %v486
      %v499 = vpack.c.bf16 %v489, %v488
      %v500 = vpack.c.bf16 %v491, %v490
      %v501 = vpack.c.bf16 %v493, %v492
      %v502 = vld [vmem:[#allocation9] sm:$0xf]
      %v503 = vld [vmem:[#allocation9 + $0x4] sm:$0xf]
      %v504 = vld [vmem:[#allocation9 + $0x8] sm:$0xf]
      %v505 = vld [vmem:[#allocation9 + $0xc] sm:$0xf]
      %v506 = vld [vmem:[#allocation9 + $0x10] sm:$0xf]
      %v507 = vld [vmem:[#allocation9 + $0x14] sm:$0xf]
      %v508 = vld [vmem:[#allocation9 + $0x18] sm:$0xf]
      %v509 = vld [vmem:[#allocation9 + $0x1c] sm:$0xf]
      %v510 = vld [vmem:[#allocation9 + $0x20] sm:$0xf]
      %v511 = vld [vmem:[#allocation9 + $0x24] sm:$0xf]
      %v512 = vld [vmem:[#allocation9 + $0x28] sm:$0xf]
      %v513 = vld [vmem:[#allocation9 + $0x2c] sm:$0xf]
      %v514 = vld [vmem:[#allocation9 + $0x30] sm:$0xf]
      %v515 = vld [vmem:[#allocation9 + $0x34] sm:$0xf]
      %v516 = vld [vmem:[#allocation9 + $0x38] sm:$0xf]
      %v517 = vld [vmem:[#allocation9 + $0x3c] sm:$0xf]
      %v534 = vunpack.c.l.b16 %v502
      %v535 = vunpack.c.l.b16 %v503
      %v536 = vunpack.c.l.b16 %v504
      %v537 = vunpack.c.l.b16 %v505
      %v538 = vunpack.c.l.b16 %v506
      %v539 = vunpack.c.l.b16 %v507
      %v540 = vunpack.c.l.b16 %v508
      %v541 = vunpack.c.l.b16 %v509
      %v542 = vunpack.c.l.b16 %v510
      %v543 = vunpack.c.l.b16 %v511
      %v544 = vunpack.c.l.b16 %v512
      %v545 = vunpack.c.l.b16 %v513
      %v546 = vunpack.c.l.b16 %v514
      %v547 = vunpack.c.l.b16 %v515
      %v548 = vunpack.c.l.b16 %v516
      %v549 = vunpack.c.l.b16 %v517
      %v550 = vpack.c.b16 %v535, %v534
      %v551 = vpack.c.b16 %v537, %v536
      %v552 = vpack.c.b16 %v539, %v538
      %v553 = vpack.c.b16 %v541, %v540
      %v554 = vpack.c.b16 %v543, %v542
      %v555 = vpack.c.b16 %v545, %v544
      %v556 = vpack.c.b16 %v547, %v546
      %v557 = vpack.c.b16 %v549, %v548
      %566 = vmatpush.bf16.msra.mxu0 %v557
      %567 = vmatpush.bf16.msra.mxu0 %v556
      %568 = vmatpush.bf16.msra.mxu0 %v555
      %569 = vmatpush.bf16.msra.mxu0 %v554
      %570 = vmatpush.bf16.msra.mxu0 %v553
      %571 = vmatpush.bf16.msra.mxu0 %v552
      %572 = vmatpush.bf16.msra.mxu0 %v551
      %573 = vmatpush.bf16.msra.mxu0 %v550
      %574 = vmatmul.bf16.gmra.mxu0 %v494
      %v575 = vpop.f32.mrf.mxu0
      %v576 = vadd.f32 0.0, %v575
      %v577 = vpop.f32.mrf.mxu0
      %v578 = vadd.f32 0.0, %v577
      %579 = vmatmul.bf16.gmra.mxu0 %v495
      %v580 = vpop.f32.mrf.mxu0
      %v581 = vadd.f32 0.0, %v580
      %v582 = vpop.f32.mrf.mxu0
      %v583 = vadd.f32 0.0, %v582
      %584 = vmatmul.bf16.gmra.mxu0 %v496
      %v585 = vpop.f32.mrf.mxu0
      %v586 = vadd.f32 0.0, %v585
      %v587 = vpop.f32.mrf.mxu0
      %v588 = vadd.f32 0.0, %v587
      %589 = vmatmul.bf16.gmra.mxu0 %v497
      %v590 = vpop.f32.mrf.mxu0
      %v591 = vadd.f32 0.0, %v590
      %v592 = vpop.f32.mrf.mxu0
      %v593 = vadd.f32 0.0, %v592
      %594 = vmatmul.bf16.gmra.mxu0 %v498
      %v595 = vpop.f32.mrf.mxu0
      %v596 = vadd.f32 0.0, %v595
      %v597 = vpop.f32.mrf.mxu0
      %v598 = vadd.f32 0.0, %v597
      %599 = vmatmul.bf16.gmra.mxu0 %v499
      %v600 = vpop.f32.mrf.mxu0
      %v601 = vadd.f32 0.0, %v600
      %v602 = vpop.f32.mrf.mxu0
      %v603 = vadd.f32 0.0, %v602
      %604 = vmatmul.bf16.gmra.mxu0 %v500
      %v605 = vpop.f32.mrf.mxu0
      %v606 = vadd.f32 0.0, %v605
      %v607 = vpop.f32.mrf.mxu0
      %v608 = vadd.f32 0.0, %v607
      %609 = vmatmul.bf16.gmra.mxu0 %v501
      %v610 = vpop.f32.mrf.mxu0
      %v611 = vadd.f32 0.0, %v610
      %v612 = vpop.f32.mrf.mxu0
      %v613 = vadd.f32 0.0, %v612
      %614 = vdwg.mxu0
      %v615 = vpack.c.bf16 %v576, %v576
      %v616 = vpack.c.bf16 %v578, %v578
      %v617 = vpack.c.bf16 %v581, %v581
      %v618 = vpack.c.bf16 %v583, %v583
      %v619 = vpack.c.bf16 %v586, %v586
      %v620 = vpack.c.bf16 %v588, %v588
      %v621 = vpack.c.bf16 %v591, %v591
      %v622 = vpack.c.bf16 %v593, %v593
      %v623 = vpack.c.bf16 %v596, %v596
      %v624 = vpack.c.bf16 %v598, %v598
      %v625 = vpack.c.bf16 %v601, %v601
      %v626 = vpack.c.bf16 %v603, %v603
      %v627 = vpack.c.bf16 %v606, %v606
      %v628 = vpack.c.bf16 %v608, %v608
      %v629 = vpack.c.bf16 %v611, %v611
      %v630 = vpack.c.bf16 %v613, %v613
      %631 = vst [vmem:[#allocation11] sm:$0xf] %v615
      %632 = vst [vmem:[#allocation11 + $0x4] sm:$0xf] %v616
      %633 = vst [vmem:[#allocation11 + $0x8] sm:$0xf] %v617
      %634 = vst [vmem:[#allocation11 + $0xc] sm:$0xf] %v618
      %635 = vst [vmem:[#allocation11 + $0x10] sm:$0xf] %v619
      %636 = vst [vmem:[#allocation11 + $0x14] sm:$0xf] %v620
      %637 = vst [vmem:[#allocation11 + $0x18] sm:$0xf] %v621
      %638 = vst [vmem:[#allocation11 + $0x1c] sm:$0xf] %v622
      %639 = vst [vmem:[#allocation11 + $0x20] sm:$0xf] %v623
      %640 = vst [vmem:[#allocation11 + $0x24] sm:$0xf] %v624
      %641 = vst [vmem:[#allocation11 + $0x28] sm:$0xf] %v625
      %642 = vst [vmem:[#allocation11 + $0x2c] sm:$0xf] %v626
      %643 = vst [vmem:[#allocation11 + $0x30] sm:$0xf] %v627
      %644 = vst [vmem:[#allocation11 + $0x34] sm:$0xf] %v628
      %645 = vst [vmem:[#allocation11 + $0x38] sm:$0xf] %v629
      %646 = vst [vmem:[#allocation11 + $0x3c] sm:$0xf] %v630
    $region45: #{tpu_custom_call.1} parent=1 // pred_fallthru
      _
    // Predicated region
    $region46: #{tpu_custom_call.1} parent=1 // pred_check
      _
    $region47: #{tpu_custom_call.1} parent=1 // pred_check_branch
      %648 = sbr.rel (0) target = $region49
    $region48: #{tpu_custom_call.1} parent=1 // pred_region
      %650 = vsyncadd [#allocation5], 0
      %s651 = sshll.u32 [#allocation11], 4
      %s652 = int_to_ptr.vmem [resolvable:$true] %s651
      %s653 = sshll.u32 %s5, 4
      %s654 = int_to_ptr.hbm [resolvable:$true] %s653
      %659 = dma.vmem_to_hbm [thread:$0]  %s652, 1024, %s654, [#allocation5], 64, 64, 4
    $region49: #{tpu_custom_call.1} parent=1 // pred_fallthru
      _
    // Predicated region
    $region50: #{tpu_custom_call.1} parent=1 // pred_check
      _
    $region51: #{tpu_custom_call.1} parent=1 // pred_check_branch
      %661 = sbr.rel (0) target = $region53
    $region52: #{tpu_custom_call.1} parent=1 // pred_region
      %663 = dma.done [#allocation5], 1024
    $region53: #{tpu_custom_call.1} parent=1 // pred_fallthru
      _
    %664 = vsyncpa [#allocation4], 1
    %665 = vsyncpa [#allocation7], 1
    %666 = vsyncpa [#allocation10], 1
    %667 = vsyncpa [#allocation5], 1

</llo_original>
